<compile_context>
chip_gen: v7x
topology: tpu7x:2x2x1
jax: 0.10.0
libtpu: 0.0.40
codegen_flags: <defaults>
</compile_context>

<pallas_src>
import math

import jax
import jax.numpy as jnp
from jax.experimental import pallas as pl
from jax.experimental.pallas import tpu as pltpu


# ---------------------------------------------------------------------------
# Embedding gather kernel: scalar-prefetch the token ids, DMA one (1,1,D) row of
# the embedding table per grid step via a data-dependent index_map.
# ---------------------------------------------------------------------------
def _gather_kernel(ids_ref, emb_row_ref, o_ref):
    del ids_ref  # only used inside the index_maps
    o_ref[...] = emb_row_ref[...]


def embed_gather_pallas(dec_ids, emb):
    """dec_ids: (N,) int32; emb: (V, D) bf16 -> (N, D) bf16."""
    n = dec_ids.shape[0]
    V, D = emb.shape
    emb3 = emb.reshape(V, 1, D)  # keep last-two block dims == full array dims
    out = pl.pallas_call(
        _gather_kernel,
        out_shape=jax.ShapeDtypeStruct((n, 1, D), emb.dtype),
        grid_spec=pltpu.PrefetchScalarGridSpec(
            num_scalar_prefetch=1,
            grid=(n,),
            in_specs=[pl.BlockSpec((1, 1, D), lambda t, ids: (ids[t], 0, 0))],
            out_specs=pl.BlockSpec((1, 1, D), lambda t, ids: (t, 0, 0)),
        ),
        compiler_params=pltpu.CompilerParams(
            dimension_semantics=("arbitrary",)),
    )(dec_ids, emb3)
    return out.reshape(n, D)


# ---------------------------------------------------------------------------
# Encoder kernel: (B*Se, F) @ (F, D) bf16 matmul + bias + ReLU, padded encoder
# positions zeroed. Batch folded into the M dimension of the matmul.
# ---------------------------------------------------------------------------
def _enc_kernel(pads_ref, x_ref, w_ref, b_ref, o_ref):
    B, Se, F = x_ref.shape
    x = x_ref[...].reshape(B * Se, F).astype(jnp.bfloat16)
    h = jnp.dot(x, w_ref[...], preferred_element_type=jnp.float32) + b_ref[...]
    h = jnp.maximum(h, 0.0).reshape(B, Se, -1)
    pads = pads_ref[...]                                          # (B, 1) int32
    pos = jax.lax.broadcasted_iota(jnp.int32, (B, Se, 1), 1)
    valid = pos < (Se - pads)[:, :, None]                         # (B, Se, 1)
    o_ref[...] = jnp.where(valid, h, 0.0)


def forward_enc_pallas(enc_x, pads, w_enc, b_enc):
    B, Se, F = enc_x.shape
    D = w_enc.shape[1]
    return pl.pallas_call(
        _enc_kernel,
        out_shape=jax.ShapeDtypeStruct((B, Se, D), jnp.float32),
        grid=(1,),
        in_specs=[
            pl.BlockSpec((B, 1), lambda i: (0, 0)),
            pl.BlockSpec((B, Se, F), lambda i: (0, 0, 0)),
            pl.BlockSpec((F, D), lambda i: (0, 0)),
            pl.BlockSpec((1, D), lambda i: (0, 0)),
        ],
        out_specs=pl.BlockSpec((B, Se, D), lambda i: (0, 0, 0)),
        compiler_params=pltpu.CompilerParams(
            dimension_semantics=("arbitrary",)),
    )(pads, enc_x, w_enc, b_enc)


# ---------------------------------------------------------------------------
# Cross-attention kernel: q = emb(dec) @ wq (scale pre-folded), kv = enc @ [wk|wv]
# (fused), masked softmax over encoder positions, context = attn @ v.
# Batch folded into the projection M dims; all matmuls bf16 -> f32 accumulate.
# ---------------------------------------------------------------------------
def _attn_kernel(pads_ref, x_ref, enc_ref, wq_ref, wkv_ref, ctx_ref):
    B, Se, D = enc_ref.shape
    _, Sd, _ = ctx_ref.shape

    x = x_ref[...]                                                 # (B*Sd, D) bf16
    q = jnp.dot(x, wq_ref[...], preferred_element_type=jnp.float32)

    enc = enc_ref[...].reshape(B * Se, D).astype(jnp.bfloat16)
    kv = jnp.dot(enc, wkv_ref[...], preferred_element_type=jnp.float32)
    k = kv[:, :D].reshape(B, Se, D)
    v = kv[:, D:].reshape(B, Se, D)

    scores = jnp.einsum("bqd,bkd->bqk",
                        q.reshape(B, Sd, D).astype(jnp.bfloat16),
                        k.astype(jnp.bfloat16),
                        preferred_element_type=jnp.float32)        # (B, Sd, Se)

    pads = pads_ref[...]                                           # (B, 1) int32
    kpos = jax.lax.broadcasted_iota(jnp.int32, (B, 1, Se), 2)
    valid = kpos < (Se - pads)[:, :, None]                         # (B, 1, Se)
    scores = jnp.where(valid, scores, -1e30)

    m = jnp.max(scores, axis=-1, keepdims=True)
    p = jnp.exp(scores - m)
    denom = jnp.sum(p, axis=-1, keepdims=True)
    attn = p * pl.reciprocal(denom, approx=True)

    ctx_ref[...] = jnp.einsum("bqk,bkd->bqd",
                              attn.astype(jnp.bfloat16),
                              v.astype(jnp.bfloat16),
                              preferred_element_type=jnp.float32)


def cross_attention_pallas(pads, x_emb, enc_out, wq, wkv, B, Sd):
    _, Se, D = enc_out.shape
    M = x_emb.shape[0]
    return pl.pallas_call(
        _attn_kernel,
        out_shape=jax.ShapeDtypeStruct((B, Sd, D), jnp.float32),
        grid=(1,),
        in_specs=[
            pl.BlockSpec((B, 1), lambda i: (0, 0)),
            pl.BlockSpec((M, D), lambda i: (0, 0)),
            pl.BlockSpec((B, Se, D), lambda i: (0, 0, 0)),
            pl.BlockSpec((D, D), lambda i: (0, 0)),
            pl.BlockSpec((D, 2 * D), lambda i: (0, 0)),
        ],
        out_specs=pl.BlockSpec((B, Sd, D), lambda i: (0, 0, 0)),
        compiler_params=pltpu.CompilerParams(
            dimension_semantics=("arbitrary",)),
    )(pads, x_emb, enc_out, wq, wkv)


# ---------------------------------------------------------------------------
# Vocab projection kernel: logits = ctx @ wo + bo, tiled over the vocab dim
# ("arbitrary" axis) with an online logsumexp kept in VMEM scratch. Emits both
# the raw logits and a per-row logsumexp (written on the last vocab tile).
# ---------------------------------------------------------------------------
def _vocab_kernel(ctx_ref, wo_ref, bo_ref, logits_ref, lse_ref, m_sc, l_sc):
    j = pl.program_id(1)

    @pl.when(j == 0)
    def _():
        m_sc[...] = jnp.full(m_sc.shape, -jnp.inf, m_sc.dtype)
        l_sc[...] = jnp.zeros(l_sc.shape, l_sc.dtype)

    x = ctx_ref[...].astype(jnp.bfloat16)                          # (TM, D)
    logits = jnp.dot(x, wo_ref[...],
                     preferred_element_type=jnp.float32) + bo_ref[...]
    logits_ref[...] = logits

    m_old = m_sc[...]
    m_new = jnp.maximum(m_old, jnp.max(logits, axis=-1, keepdims=True))
    l_sc[...] = (l_sc[...] * jnp.exp(m_old - m_new)
                 + jnp.sum(jnp.exp(logits - m_new), axis=-1, keepdims=True))
    m_sc[...] = m_new

    @pl.when(j == pl.num_programs(1) - 1)
    def _():
        lse_ref[...] = m_sc[...] + jnp.log(l_sc[...])


def vocab_proj_pallas(ctx2d, wo, bo, tv=128):
    M, D = ctx2d.shape
    V = wo.shape[1]
    tm = M                    # toy shapes: single M tile; real sizes would use 128/256
    tv = min(tv, V)
    assert V % tv == 0 and M % tm == 0
    return pl.pallas_call(
        _vocab_kernel,
        out_shape=(jax.ShapeDtypeStruct((M, V), jnp.float32),
                   jax.ShapeDtypeStruct((M, 1), jnp.float32)),
        grid=(M // tm, V // tv),
        in_specs=[
            pl.BlockSpec((tm, D), lambda i, j: (i, 0)),
            pl.BlockSpec((D, tv), lambda i, j: (0, j)),
            pl.BlockSpec((1, tv), lambda i, j: (0, j)),
        ],
        out_specs=[
            pl.BlockSpec((tm, tv), lambda i, j: (i, j)),
            pl.BlockSpec((tm, 1), lambda i, j: (i, 0)),
        ],
        scratch_shapes=[pltpu.VMEM((tm, 1), jnp.float32),
                        pltpu.VMEM((tm, 1), jnp.float32)],
        compiler_params=pltpu.CompilerParams(
            dimension_semantics=("parallel", "arbitrary")),
    )(ctx2d, wo, bo)


# ---------------------------------------------------------------------------
# Log-softmax finalize kernel: out = logits - lse (vocab tiled, fully parallel).
# ---------------------------------------------------------------------------
def _lsm_kernel(logits_ref, lse_ref, o_ref):
    o_ref[...] = logits_ref[...] - lse_ref[...]


def log_softmax_pallas(logits2d, lse, tv=128):
    M, V = logits2d.shape
    tm = M
    tv = min(tv, V)
    return pl.pallas_call(
        _lsm_kernel,
        out_shape=jax.ShapeDtypeStruct((M, V), jnp.float32),
        grid=(M // tm, V // tv),
        in_specs=[pl.BlockSpec((tm, tv), lambda i, j: (i, j)),
                  pl.BlockSpec((tm, 1), lambda i, j: (i, 0))],
        out_specs=pl.BlockSpec((tm, tv), lambda i, j: (i, j)),
        compiler_params=pltpu.CompilerParams(
            dimension_semantics=("parallel", "parallel")),
    )(logits2d, lse)


# ---------------------------------------------------------------------------
# CaptioningModel: reproduces the base-class forward() (mode='forward') flow.
# ---------------------------------------------------------------------------
class CaptioningModel:
    def __init__(self, feat_dim, d_model, vocab_size, key):
        self.rank = 0
        self.vocab_size = vocab_size
        ks = jax.random.split(key, 8)
        s = 1.0 / math.sqrt(d_model)
        wq = jax.random.normal(ks[3], (d_model, d_model), jnp.float32) * s
        wk = jax.random.normal(ks[4], (d_model, d_model), jnp.float32) * s
        wv = jax.random.normal(ks[5], (d_model, d_model), jnp.float32) * s
        self.params = {
            # bf16 weights (MXU inputs), f32 biases.
            "w_enc": (jax.random.normal(ks[0], (feat_dim, d_model), jnp.float32)
                      * s).astype(jnp.bfloat16),
            "b_enc": jax.random.normal(ks[1], (1, d_model), jnp.float32) * 0.01,
            "emb":   (jax.random.normal(ks[2], (vocab_size, d_model), jnp.float32)
                      * s).astype(jnp.bfloat16),
            # attention 1/sqrt(D) folded into wq; wk|wv fused into one weight.
            "wq":    (wq * s).astype(jnp.bfloat16),
            "wkv":   jnp.concatenate([wk, wv], axis=1).astype(jnp.bfloat16),
            "wo":    (jax.random.normal(ks[6], (d_model, vocab_size), jnp.float32)
                      * s).astype(jnp.bfloat16),
            "bo":    jax.random.normal(ks[7], (1, vocab_size), jnp.float32) * 0.01,
        }

    def check_required_attributes(self):
        if self.rank is None:
            raise NotImplementedError(
                "Subclass must assign the rank integer according to the GPU group")

    def forward_enc(self, enc_input, enc_input_num_pads):
        pads = jnp.asarray(enc_input_num_pads, dtype=jnp.int32).reshape(-1, 1)
        return forward_enc_pallas(enc_input, pads,
                                  self.params["w_enc"], self.params["b_enc"])

    def forward_dec(self, cross_input, enc_input_num_pads, dec_input,
                    dec_input_num_pads, apply_log_softmax=False):
        del dec_input_num_pads  # TODO(synk): decoder-side padding not masked here.
        pads = jnp.asarray(enc_input_num_pads, dtype=jnp.int32).reshape(-1, 1)
        dec_ids = jnp.asarray(dec_input, dtype=jnp.int32)
        B, Sd = dec_ids.shape
        V = self.params["wo"].shape[1]

        # 1) embedding gather (no one-hot): one DMA'd row per token.
        x_emb = embed_gather_pallas(dec_ids.reshape(-1), self.params["emb"])
        # 2) cross attention over encoder output (all batches in one block).
        ctx = cross_attention_pallas(pads, x_emb, cross_input,
                                     self.params["wq"], self.params["wkv"], B, Sd)
        # 3) vocab projection, tiled over V with online logsumexp.
        D = ctx.shape[-1]
        logits2d, lse = vocab_proj_pallas(ctx.reshape(B * Sd, D),
                                          self.params["wo"], self.params["bo"])
        out2d = log_softmax_pallas(logits2d, lse) if apply_log_softmax else logits2d
        return out2d.reshape(B, Sd, V)

    def forward(self, enc_x, dec_x=None, enc_x_num_pads=(0,), dec_x_num_pads=(0,),
                apply_log_softmax=False, mode="forward", **kwargs):
        if mode == "forward":
            x = self.forward_enc(enc_x, enc_x_num_pads)
            y = self.forward_dec(x, enc_x_num_pads, dec_x, dec_x_num_pads,
                                 apply_log_softmax)
            return y
        # TODO(synk): 'beam_search' / 'sampling' modes (host-side loops, topk
        # bookkeeping, categorical sampling) are not translated to kernels.
        raise NotImplementedError(f"mode={mode!r} not implemented in Pallas port")


# ---------------------------------------------------------------------------
# Pure-JAX reference mirroring the kernels' math (same bf16 casts, f32 accum).
# ---------------------------------------------------------------------------
def _reference_forward(enc_x, dec_x, enc_pads, params, apply_log_softmax):
    B, Se, F = enc_x.shape
    D = params["w_enc"].shape[1]
    V = params["wo"].shape[1]
    Sd = dec_x.shape[1]
    pads = jnp.asarray(enc_pads, dtype=jnp.int32)

    h = jnp.dot(enc_x.reshape(B * Se, F).astype(jnp.bfloat16), params["w_enc"],
                preferred_element_type=jnp.float32) + params["b_enc"]
    h = jnp.maximum(h, 0.0).reshape(B, Se, D)
    pos = jnp.arange(Se)[None, :, None]
    enc_out = jnp.where(pos < (Se - pads)[:, None, None], h, 0.0)

    x = jnp.take(params["emb"], dec_x.reshape(-1), axis=0)        # (B*Sd, D) bf16
    q = jnp.dot(x, params["wq"], preferred_element_type=jnp.float32)
    kv = jnp.dot(enc_out.reshape(B * Se, D).astype(jnp.bfloat16), params["wkv"],
                 preferred_element_type=jnp.float32)
    k = kv[:, :D].reshape(B, Se, D)
    v = kv[:, D:].reshape(B, Se, D)
    scores = jnp.einsum("bqd,bkd->bqk",
                        q.reshape(B, Sd, D).astype(jnp.bfloat16),
                        k.astype(jnp.bfloat16),
                        preferred_element_type=jnp.float32)
    kmask = jnp.arange(Se)[None, None, :] < (Se - pads)[:, None, None]
    scores = jnp.where(kmask, scores, -1e30)
    attn = jax.nn.softmax(scores, axis=-1)
    ctx = jnp.einsum("bqk,bkd->bqd",
                     attn.astype(jnp.bfloat16), v.astype(jnp.bfloat16),
                     preferred_element_type=jnp.float32)
    logits = jnp.dot(ctx.reshape(B * Sd, D).astype(jnp.bfloat16), params["wo"],
                     preferred_element_type=jnp.float32) + params["bo"]
    if apply_log_softmax:
        logits = jax.nn.log_softmax(logits, axis=-1)
    return logits.reshape(B, Sd, V)


if __name__ == "__main__":
    # Small but lane-aligned shapes (D, F, V multiples of 128 per the perf review).
    B, ENC_SEQ, FEAT = 2, 16, 128
    D_MODEL, DEC_SEQ, VOCAB = 128, 8, 256

    key = jax.random.PRNGKey(0)
    k_model, k_enc, k_dec = jax.random.split(key, 3)

    model = CaptioningModel(FEAT, D_MODEL, VOCAB, k_model)

    enc_x = jax.random.normal(k_enc, (B, ENC_SEQ, FEAT), jnp.float32)
    dec_x = jax.random.randint(k_dec, (B, DEC_SEQ), 0, VOCAB, dtype=jnp.int32)
    enc_x_num_pads = [0, 3]
    dec_x_num_pads = [0, 0]

    out = model.forward(enc_x, dec_x,
                        enc_x_num_pads=enc_x_num_pads,
                        dec_x_num_pads=dec_x_num_pads,
                        apply_log_softmax=True,
                        mode="forward")
    out = jax.block_until_ready(out)

    ref = _reference_forward(enc_x, dec_x, enc_x_num_pads, model.params,
                             apply_log_softmax=True)
    assert out.shape == (B, DEC_SEQ, VOCAB), out.shape
    err = float(jnp.max(jnp.abs(out - ref)))
    # Tolerance covers the approximate EUP reciprocal in the softmax plus minor
    # MXU-vs-XLA f32 accumulation-order differences (bf16 casts are identical on
    # both paths, so they do not contribute).
    assert err < 5e-2, err

    print("KERNEL_OK")
</pallas_src>

<mosaic_0001>
module attributes {stable_mosaic.version = 11 : i64} {
  func.func @_enc_kernel(%arg0: i32, %arg1: memref<2x1xi32, #tpu.memory_space<vmem>>, %arg2: memref<2x16x128xf32, #tpu.memory_space<vmem>>, %arg3: memref<128x128xbf16, #tpu.memory_space<vmem>>, %arg4: memref<1x128xf32, #tpu.memory_space<vmem>>, %arg5: memref<2x16x128xf32, #tpu.memory_space<vmem>>) attributes {dimension_semantics = [#tpu.dimension_semantics<arbitrary>], iteration_bounds = array<i64: 1>, scalar_prefetch = 0 : i64, scratch_operands = 0 : i64, tpu.core_type = #tpu.core_type<tc>, window_params = [{pipeline_mode = #tpu.pipeline_mode<synchronous>, transform_indices = @transform_0, window_bounds = array<i64: 2, 1>}, {pipeline_mode = #tpu.pipeline_mode<synchronous>, transform_indices = @transform_1, window_bounds = array<i64: 2, 16, 128>}, {pipeline_mode = #tpu.pipeline_mode<synchronous>, transform_indices = @transform_2, window_bounds = array<i64: 128, 128>}, {pipeline_mode = #tpu.pipeline_mode<synchronous>, transform_indices = @transform_3, window_bounds = array<i64: 1, 128>}, {pipeline_mode = #tpu.pipeline_mode<synchronous>, transform_indices = @transform_4, window_bounds = array<i64: 2, 16, 128>}]} {
    %c0 = arith.constant 0 : index
    %c0_0 = arith.constant 0 : index
    %c0_1 = arith.constant 0 : index
    %0 = vector.load %arg2[%c0, %c0_0, %c0_1] : memref<2x16x128xf32, #tpu.memory_space<vmem>>, vector<2x16x128xf32>
    %1 = vector.shape_cast %0 : vector<2x16x128xf32> to vector<32x128xf32>
    %2 = arith.truncf %1 : vector<32x128xf32> to vector<32x128xbf16>
    %c0_2 = arith.constant 0 : index
    %c0_3 = arith.constant 0 : index
    %3 = vector.load %arg3[%c0_2, %c0_3] : memref<128x128xbf16, #tpu.memory_space<vmem>>, vector<128x128xbf16>
    %cst = arith.constant dense<0.000000e+00> : vector<32x128xf32>
    %4 = tpu.matmul %2, %3, %cst {dimension_numbers = #tpu.dot_dimension_numbers<[1], [0], [0], [1], [0, 0, 1, 1], [], []>} : vector<32x128xbf16>, vector<128x128xbf16>, vector<32x128xf32> -> vector<32x128xf32>
    %c0_4 = arith.constant 0 : index
    %c0_5 = arith.constant 0 : index
    %5 = vector.load %arg4[%c0_4, %c0_5] : memref<1x128xf32, #tpu.memory_space<vmem>>, vector<1x128xf32>
    %6 = vector.broadcast %5 : vector<1x128xf32> to vector<32x128xf32>
    %7 = arith.addf %4, %6 : vector<32x128xf32>
    %cst_6 = arith.constant 0.000000e+00 : f32
    %8 = vector.broadcast %cst_6 : f32 to vector<32x128xf32>
    %9 = arith.maximumf %7, %8 : vector<32x128xf32>
    %10 = vector.shape_cast %9 : vector<32x128xf32> to vector<2x16x128xf32>
    %c0_7 = arith.constant 0 : index
    %c0_8 = arith.constant 0 : index
    %11 = vector.load %arg1[%c0_7, %c0_8] : memref<2x1xi32, #tpu.memory_space<vmem>>, vector<2x1xi32>
    %12 = tpu.iota {dimensions = array<i32: 1>} : vector<2x16x1xi32>
    %c16_i32 = arith.constant 16 : i32
    %13 = vector.broadcast %c16_i32 : i32 to vector<2x1xi32>
    %14 = arith.subi %13, %11 : vector<2x1xi32>
    %15 = vector.shape_cast %14 : vector<2x1xi32> to vector<2x1x1xi32>
    %16 = vector.broadcast %15 : vector<2x1x1xi32> to vector<2x16x1xi32>
    %17 = arith.cmpi slt, %12, %16 : vector<2x16x1xi32>
    %cst_9 = arith.constant 0.000000e+00 : f32
    %18 = vector.shape_cast %17 : vector<2x16x1xi1> to vector<2x16x1xi1>
    %19 = vector.broadcast %18 : vector<2x16x1xi1> to vector<2x16x128xi1>
    %20 = vector.broadcast %cst_9 : f32 to vector<2x16x128xf32>
    %21 = arith.select %19, %10, %20 : vector<2x16x128xi1>, vector<2x16x128xf32>
    %c0_10 = arith.constant 0 : index
    %c0_11 = arith.constant 0 : index
    %c0_12 = arith.constant 0 : index
    %22 = vector.load %arg5[%c0_10, %c0_11, %c0_12] : memref<2x16x128xf32, #tpu.memory_space<vmem>>, vector<2x16x128xf32>
    tpu.vector_store %arg5[%c0_10, %c0_11, %c0_12], %21 {strides = array<i32>} : memref<2x16x128xf32, #tpu.memory_space<vmem>>, vector<2x16x128xf32>,
    return
  }
  func.func @transform_0(%arg0: i32) -> (i32, i32) {
    %c0_i32 = arith.constant 0 : i32
    %c0_i32_0 = arith.constant 0 : i32
    %c0_i32_1 = arith.constant 0 : i32
    return %c0_i32, %c0_i32_0 : i32, i32
  }
  func.func @transform_1(%arg0: i32) -> (i32, i32, i32) {
    %c0_i32 = arith.constant 0 : i32
    %c0_i32_0 = arith.constant 0 : i32
    %c0_i32_1 = arith.constant 0 : i32
    %c0_i32_2 = arith.constant 0 : i32
    return %c0_i32, %c0_i32_0, %c0_i32_1 : i32, i32, i32
  }
  func.func @transform_2(%arg0: i32) -> (i32, i32) {
    %c0_i32 = arith.constant 0 : i32
    %c0_i32_0 = arith.constant 0 : i32
    %c0_i32_1 = arith.constant 0 : i32
    return %c0_i32, %c0_i32_0 : i32, i32
  }
  func.func @transform_3(%arg0: i32) -> (i32, i32) {
    %c0_i32 = arith.constant 0 : i32
    %c0_i32_0 = arith.constant 0 : i32
    %c0_i32_1 = arith.constant 0 : i32
    return %c0_i32, %c0_i32_0 : i32, i32
  }
  func.func @transform_4(%arg0: i32) -> (i32, i32, i32) {
    %c0_i32 = arith.constant 0 : i32
    %c0_i32_0 = arith.constant 0 : i32
    %c0_i32_1 = arith.constant 0 : i32
    %c0_i32_2 = arith.constant 0 : i32
    return %c0_i32, %c0_i32_0, %c0_i32_1 : i32, i32, i32
  }
}

</mosaic_0001>

<llo_original>
// kernel: tpu_custom_call.1
$region0: #{tpu_custom_call.1}
  #allocation0 [shape = 'u32[]', space=smem, size = 0x4, offset = 0x4, fixed_abs, tag = 'smem constant byte address 0x4 - core index']
  #allocation1 [shape = 'u32[144,128]{1,0:T(1,128)}', space=vmem, size = 0x12000, scoped, tag = 'internal scratch']
  %s0 = inlined_call_operand.vmem [shape: s32[2,1], index: 0, kind: input, shape index: {}]
  %s1 = inlined_call_operand.hbm [shape: f32[2,16,128], index: 1, kind: input, shape index: {}]
  %s2 = inlined_call_operand.hbm [shape: bf16[128,128], index: 2, kind: input, shape index: {}]
  %s3 = inlined_call_operand.vmem [shape: f32[1,128], index: 3, kind: input, shape index: {}]
  %s4 = inlined_call_operand.hbm [shape: f32[2,16,128], index: 4, kind: output, shape index: {}]
  %s5 = sld [smem:[#allocation0]]
  $region34: #{tpu_custom_call.1} parent=0
    _
  %s7 = ssub.s32 1, %s5
  %s8 = scalar_select 0, %s7, %s5
  $region1: #{tpu_custom_call.1} parent=0
    #allocation2 [shape = 'u8[16384]{0}', space=vmem, size = 0x4000, scoped, tag = 'input window, operand 1, single buffered']
    #allocation3 [shape = 's32[1]{0}', space=sflag, size = 0x4, scoped, tag = 'scoped memory for tpu_custom_call.1']
    #allocation4 [shape = 's32[1]{0}', space=sflag, size = 0x4, scoped, tag = 'scoped memory for tpu_custom_call.1']
    #allocation5 [shape = 'u8[32768]{0}', space=vmem, size = 0x8000, scoped, tag = 'input window, operand 2, single buffered']
    #allocation6 [shape = 's32[1]{0}', space=sflag, size = 0x4, scoped, tag = 'scoped memory for tpu_custom_call.1']
    #allocation7 [shape = 'u8[16384]{0}', space=vmem, size = 0x4000, scoped, tag = 'output window, operand 0, single buffered']
    %9 = vsyncpa [#allocation3], 0
    %10 = vsyncpa [#allocation6], 0
    %11 = vsyncpa [#allocation4], 0
    // Predicated region
    $region2: #{tpu_custom_call.1} parent=1 // pred_check
      _
    $region3: #{tpu_custom_call.1} parent=1 // pred_check_branch
      %13 = sbr.rel (0) target = $region5
    $region4: #{tpu_custom_call.1} parent=1 // pred_region
      _
    $region5: #{tpu_custom_call.1} parent=1 // pred_fallthru
      _
    // Predicated region
    $region6: #{tpu_custom_call.1} parent=1 // pred_check
      _
    $region7: #{tpu_custom_call.1} parent=1 // pred_check_branch
      %15 = sbr.rel (0) target = $region9
    $region8: #{tpu_custom_call.1} parent=1 // pred_region
      %s17 = ssub.s32 512, 512
      %18 = vsyncadd [#allocation3], %s17
      %s19 = sshll.u32 [#allocation2], 4
      %s20 = int_to_ptr.vmem [resolvable:$true] %s19
      %25 = dma.hbm_to_vmem [thread:$0]  %s1, 512, %s20, [#allocation3], 128, 128, 8
    $region9: #{tpu_custom_call.1} parent=1 // pred_fallthru
      _
    // Predicated region
    $region10: #{tpu_custom_call.1} parent=1 // pred_check
      _
    $region11: #{tpu_custom_call.1} parent=1 // pred_check_branch
      %27 = sbr.rel (0) target = $region13
    $region12: #{tpu_custom_call.1} parent=1 // pred_region
      %s29 = ssub.s32 1024, 1024
      %30 = vsyncadd [#allocation6], %s29
      %s31 = sshll.u32 [#allocation5], 4
      %s32 = int_to_ptr.vmem [resolvable:$true] %s31
      %37 = dma.hbm_to_vmem [thread:$0]  %s2, 1024, %s32, [#allocation6], 64, 64, 4
    $region13: #{tpu_custom_call.1} parent=1 // pred_fallthru
      _
    // Predicated region
    $region14: #{tpu_custom_call.1} parent=1 // pred_check
      _
    $region15: #{tpu_custom_call.1} parent=1 // pred_check_branch
      %39 = sbr.rel (0) target = $region17
    $region16: #{tpu_custom_call.1} parent=1 // pred_region
      _
    $region17: #{tpu_custom_call.1} parent=1 // pred_fallthru
      _
    // Predicated region
    $region18: #{tpu_custom_call.1} parent=1 // pred_check
      _
    $region19: #{tpu_custom_call.1} parent=1 // pred_check_branch
      %41 = sbr.rel (0) target = $region21
    $region20: #{tpu_custom_call.1} parent=1 // pred_region
      %42 = dma.done [#allocation3], 512
    $region21: #{tpu_custom_call.1} parent=1 // pred_fallthru
      _
    // Predicated region
    $region22: #{tpu_custom_call.1} parent=1 // pred_check
      _
    $region23: #{tpu_custom_call.1} parent=1 // pred_check_branch
      %44 = sbr.rel (0) target = $region25
    $region24: #{tpu_custom_call.1} parent=1 // pred_region
      %45 = dma.done [#allocation6], 1024
    $region25: #{tpu_custom_call.1} parent=1 // pred_fallthru
      _
    %v47 = vld [vmem:[#allocation2] sm:$0xff]
    %v48 = vld [vmem:[#allocation2 + $0x8] sm:$0xff]
    %v49 = vld [vmem:[#allocation2 + $0x10] sm:$0xff]
    %v50 = vld [vmem:[#allocation2 + $0x18] sm:$0xff]
    %v51 = vpack.c.bf16 %v48, %v47
    %v52 = vpack.c.bf16 %v50, %v49
    %v53 = vld [vmem:[#allocation5] sm:$0xf]
    %v54 = vld [vmem:[#allocation5 + $0x4] sm:$0xf]
    %v55 = vld [vmem:[#allocation5 + $0x8] sm:$0xf]
    %v56 = vld [vmem:[#allocation5 + $0xc] sm:$0xf]
    %v57 = vld [vmem:[#allocation5 + $0x10] sm:$0xf]
    %v58 = vld [vmem:[#allocation5 + $0x14] sm:$0xf]
    %v59 = vld [vmem:[#allocation5 + $0x18] sm:$0xf]
    %v60 = vld [vmem:[#allocation5 + $0x1c] sm:$0xf]
    %v61 = vld [vmem:[#allocation5 + $0x20] sm:$0xf]
    %v62 = vld [vmem:[#allocation5 + $0x24] sm:$0xf]
    %v63 = vld [vmem:[#allocation5 + $0x28] sm:$0xf]
    %v64 = vld [vmem:[#allocation5 + $0x2c] sm:$0xf]
    %v65 = vld [vmem:[#allocation5 + $0x30] sm:$0xf]
    %v66 = vld [vmem:[#allocation5 + $0x34] sm:$0xf]
    %v67 = vld [vmem:[#allocation5 + $0x38] sm:$0xf]
    %v68 = vld [vmem:[#allocation5 + $0x3c] sm:$0xf]
    %v69 = vld [vmem:[%s3] sm:$0x1]
    %v71 = vlaneseq
    %v72 = vshrl.u32 %v71, 7
    %v73 = vsub.s32 0, %v72
    %v74 = vrot.slane %v69, %v73
    %v92 = vunpack.c.l.b16 %v53
    %v93 = vunpack.c.l.b16 %v54
    %v94 = vunpack.c.l.b16 %v55
    %v95 = vunpack.c.l.b16 %v56
    %v96 = vunpack.c.l.b16 %v57
    %v97 = vunpack.c.l.b16 %v58
    %v98 = vunpack.c.l.b16 %v59
    %v99 = vunpack.c.l.b16 %v60
    %v100 = vunpack.c.l.b16 %v61
    %v101 = vunpack.c.l.b16 %v62
    %v102 = vunpack.c.l.b16 %v63
    %v103 = vunpack.c.l.b16 %v64
    %v104 = vunpack.c.l.b16 %v65
    %v105 = vunpack.c.l.b16 %v66
    %v106 = vunpack.c.l.b16 %v67
    %v107 = vunpack.c.l.b16 %v68
    %v108 = vpack.c.b16 %v93, %v92
    %v109 = vpack.c.b16 %v95, %v94
    %v110 = vpack.c.b16 %v97, %v96
    %v111 = vpack.c.b16 %v99, %v98
    %v112 = vpack.c.b16 %v101, %v100
    %v113 = vpack.c.b16 %v103, %v102
    %v114 = vpack.c.b16 %v105, %v104
    %v115 = vpack.c.b16 %v107, %v106
    %124 = vmatprep.subr.bf16.mxu0 0
    %125 = vmatpush1.bf16.msra.mxu0 %v108
    %126 = vmatprep.subr.bf16.mxu0 0
    %127 = vmatpush1.bf16.msra.mxu0 %v109
    %128 = vmatprep.subr.bf16.mxu0 0
    %129 = vmatpush1.bf16.msra.mxu0 %v110
    %130 = vmatprep.subr.bf16.mxu0 0
    %131 = vmatpush1.bf16.msra.mxu0 %v111
    %132 = vmatprep.subr.bf16.mxu0 0
    %133 = vmatpush1.bf16.msra.mxu0 %v112
    %134 = vmatprep.subr.bf16.mxu0 0
    %135 = vmatpush1.bf16.msra.mxu0 %v113
    %136 = vmatprep.subr.bf16.mxu0 0
    %137 = vmatpush1.bf16.msra.mxu0 %v114
    %138 = vmatprep.subr.bf16.mxu0 0
    %139 = vmatpush1.bf16.msra.mxu0 %v115
    %140 = vmatprep.subr.bf16.mxu0 0
    %141 = vmatpush1.bf16.msra.mxu0 0
    %142 = vmatprep.subr.bf16.mxu0 0
    %143 = vmatpush1.bf16.msra.mxu0 0
    %144 = vmatprep.subr.bf16.mxu0 0
    %145 = vmatpush1.bf16.msra.mxu0 0
    %146 = vmatprep.subr.bf16.mxu0 0
    %147 = vmatpush1.bf16.msra.mxu0 0
    %148 = vmatprep.subr.bf16.mxu0 0
    %149 = vmatpush1.bf16.msra.mxu0 0
    %150 = vmatprep.subr.bf16.mxu0 0
    %151 = vmatpush1.bf16.msra.mxu0 0
    %152 = vmatprep.subr.bf16.mxu0 0
    %153 = vmatpush1.bf16.msra.mxu0 0
    %154 = vmatprep.subr.bf16.mxu0 0
    %155 = vmatpush1.bf16.msra.mxu0 0
    %156 = vmatprep.mubr.bf16.mxu0 0
    %157 = vmatmul.mubr.bf16.gmra.mrb[0].mxu0 %v51
    %v158 = vpop.f32.mrb[0].mxu0
    %v159 = vadd.f32 %v74, %v158
    %v160 = vpop.f32.mrb[0].mxu0
    %v161 = vpop.f32.mrb[0].mxu0
    %v162 = vadd.f32 %v74, %v161
    %v163 = vpop.f32.mrb[0].mxu0
    %164 = vmatprep.mubr.bf16.mxu0 0
    %165 = vmatmul.mubr.bf16.gmra.mrb[0].mxu0 %v52
    %v166 = vpop.f32.mrb[0].mxu0
    %v167 = vadd.f32 %v74, %v166
    %v168 = vpop.f32.mrb[0].mxu0
    %v169 = vpop.f32.mrb[0].mxu0
    %v170 = vadd.f32 %v74, %v169
    %v171 = vpop.f32.mrb[0].mxu0
    %172 = vdwg.mxu0
    %v173 = vmax.f32 %v159, 0.0
    %v174 = vmax.f32 %v162, 0.0
    %v175 = vmax.f32 %v167, 0.0
    %v176 = vmax.f32 %v170, 0.0
    %v177 = vld [vmem:[%s0] sm:$0x3]
    %v178 = vlaneseq
    %v179 = vshrl.u32 %v178, 7
    %v180 = vadd.s32 %v179, 8
    %v181 = vsub.s32 16, %v177
    %v183 = vunpack.c.l.s4 1966171168
    %v184 = vunpack.c.0.s8 %v183
    %v185 = vlaneseq
    %v186 = vshrl.u32 %v185, 7
    %v187 = vsub.s32 %v184, %v186
    %v188 = vrot.slane %v181, %v187
    %v189 = vcombine.high %v188, %v188
    %v191 = vunpack.c.l.s4 1966171168
    %v192 = vunpack.c.0.s8 %v191
    %v193 = vlaneseq
    %v194 = vshrl.u32 %v193, 7
    %v195 = vsub.s32 %v192, %v194
    %v196 = vrot.slane %v188, %v195
    %v198 = vunpack.c.l.s4 1966171168
    %v199 = vunpack.c.0.s8 %v198
    %v200 = vlaneseq
    %v201 = vshrl.u32 %v200, 7
    %v202 = vsub.s32 %v199, %v201
    %v203 = vrot.slane %v189, %v202
    %v204 = vlaneseq
    %v205 = vshrl.u32 %v204, 7
    %v206 = vsub.s32 0, %v205
    %v207 = vrot.slane %v196, %v206
    %v208 = vlaneseq
    %v209 = vshrl.u32 %v208, 7
    %v210 = vsub.s32 0, %v209
    %v211 = vrot.slane %v203, %v210
    %vm212 = vcmp.lt.s32.totalorder %v179, %v207
    %vm213 = vcmp.lt.s32.totalorder %v180, %v207
    %vm214 = vcmp.lt.s32.totalorder %v179, %v211
    %vm215 = vcmp.lt.s32.totalorder %v180, %v211
    %v216 = vsel %vm212, 1, 0
    %v217 = vsel %vm213, 1, 0
    %v218 = vsel %vm214, 1, 0
    %v219 = vsel %vm215, 1, 0
    %220 = vset.pattern.permute.xlu0 0
    %221 = vperm.xlu0 %220, %v216
    %v222 = vpop.permute.xlu0 %221
    %223 = vset.pattern.permute.xlu0 0
    %224 = vperm.xlu0 %223, %v217
    %v225 = vpop.permute.xlu0 %224
    %226 = vset.pattern.permute.xlu0 0
    %227 = vperm.xlu0 %226, %v218
    %v228 = vpop.permute.xlu0 %227
    %229 = vset.pattern.permute.xlu0 0
    %230 = vperm.xlu0 %229, %v219
    %v231 = vpop.permute.xlu0 %230
    %vm232 = vcmp.eq.s32.totalorder %v222, 1
    %vm233 = vcmp.eq.s32.totalorder %v225, 1
    %vm234 = vcmp.eq.s32.totalorder %v228, 1
    %vm235 = vcmp.eq.s32.totalorder %v231, 1
    %v236 = vsel %vm232, %v173, 0.0
    %v237 = vsel %vm233, %v174, 0.0
    %v238 = vsel %vm234, %v175, 0.0
    %v239 = vsel %vm235, %v176, 0.0
    %240 = vst [vmem:[#allocation7] sm:$0xff] %v236
    %241 = vst [vmem:[#allocation7 + $0x8] sm:$0xff] %v237
    %242 = vst [vmem:[#allocation7 + $0x10] sm:$0xff] %v238
    %243 = vst [vmem:[#allocation7 + $0x18] sm:$0xff] %v239
    // Predicated region
    $region26: #{tpu_custom_call.1} parent=1 // pred_check
      _
    $region27: #{tpu_custom_call.1} parent=1 // pred_check_branch
      %245 = sbr.rel (0) target = $region29
    $region28: #{tpu_custom_call.1} parent=1 // pred_region
      %s247 = ssub.s32 512, 512
      %248 = vsyncadd [#allocation4], %s247
      %s249 = sshll.u32 [#allocation7], 4
      %s250 = int_to_ptr.vmem [resolvable:$true] %s249
      %255 = dma.vmem_to_hbm [thread:$0]  %s250, 512, %s4, [#allocation4], 128, 128, 8
    $region29: #{tpu_custom_call.1} parent=1 // pred_fallthru
      _
    // Predicated region
    $region30: #{tpu_custom_call.1} parent=1 // pred_check
      _
    $region31: #{tpu_custom_call.1} parent=1 // pred_check_branch
      %257 = sbr.rel (0) target = $region33
    $region32: #{tpu_custom_call.1} parent=1 // pred_region
      %258 = dma.done [#allocation4], 512
    $region33: #{tpu_custom_call.1} parent=1 // pred_fallthru
      _
    %259 = vsyncpa [#allocation3], 1
    %260 = vsyncpa [#allocation6], 1
    %261 = vsyncpa [#allocation4], 1

</llo_original>
